<compile_context>
chip_gen: v5e
topology: v5e:2x2
jax: 0.10.0
libtpu: 0.0.40
codegen_flags: <defaults>
</compile_context>

<pallas_src>
import functools

import jax
import jax.numpy as jnp
from jax.experimental import pallas as pl
from jax.experimental.pallas import tpu as pltpu


def _round_up(x, m):
    return ((x + m - 1) // m) * m


# Batch tile for the grid path (per-tile VMEM is tiny, so go big to amortize
# per-grid-step overhead and give the MXU a taller M tile).
_BATCH_BLOCK = 512


def _deeplog_kernel(num_layers, x_ref, w_ref, b_ref, wfc_ref, bfc_ref, out_ref):
    """x:(bb,P)  w:(L,3,P,P)  b:(L,3,1,P)  wfc:(P,NPAD)  bfc:(1,NPAD)  out:(bb,NPAD)

    Per layer (h0 = c0 = 0, seq_len == 1, forget gate dead):
        c = sigmoid(x@Wi + bi) * tanh(x@Wg + bg)
        h = sigmoid(x@Wo + bo) * tanh(c)
    All ops are full-vreg; padded lanes (>= hidden_size) are exactly zero.
    Gate slots in the weight slab: 0 = input gate i, 1 = output gate o,
    2 = cell candidate g.
    """
    h = x_ref[...]                                          # (bb, P)

    for layer in range(num_layers):
        gi = jnp.dot(h, w_ref[layer, 0],
                     preferred_element_type=jnp.float32) + b_ref[layer, 0]
        go = jnp.dot(h, w_ref[layer, 1],
                     preferred_element_type=jnp.float32) + b_ref[layer, 1]
        gg = jnp.dot(h, w_ref[layer, 2],
                     preferred_element_type=jnp.float32) + b_ref[layer, 2]

        c = jax.nn.sigmoid(gi) * jnp.tanh(gg)               # valid lanes [0, H)
        h = jax.nn.sigmoid(go) * jnp.tanh(c)                # padded lanes == 0

    # fc: rows of wfc beyond hidden_size are zero, so a plain dot is exact.
    out_ref[...] = (
        jnp.dot(h, wfc_ref[...], preferred_element_type=jnp.float32)
        + bfc_ref[...]
    )


def pack_params(params, *, input_size, hidden_size, num_layers, num_keys):
    """One-time packing: transpose, fuse biases, drop dead weights (W_hh and
    the forget gate), and lay every gate out in its own lane-padded (P, P)
    block so the kernel never slices lanes.  Call once, reuse per forward."""
    H = hidden_size
    P = _round_up(max(input_size, hidden_size), 128)   # padded contraction/lanes
    NPAD = _round_up(num_keys, 128)                    # padded output lanes

    w_layers, b_layers = [], []
    for layer in range(num_layers):
        w_ih, _w_hh, b_ih, b_hh = params["lstm"][layer]     # w_hh dead (h0 == 0)
        w_ih = jnp.asarray(w_ih, jnp.float32)               # (4H, in_dim), i,f,g,o
        bias = jnp.asarray(b_ih, jnp.float32) + jnp.asarray(b_hh, jnp.float32)
        in_dim = w_ih.shape[1]

        # Keep (i, o, g); forget gate f multiplies c0 == 0 -> dropped.
        gate_w, gate_b = [], []
        for lo, hi in ((0, H), (3 * H, 4 * H), (2 * H, 3 * H)):   # i, o, g
            wpad = jnp.zeros((P, P), jnp.float32).at[:in_dim, :H].set(w_ih[lo:hi].T)
            bpad = jnp.zeros((1, P), jnp.float32).at[0, :H].set(bias[lo:hi])
            gate_w.append(wpad)
            gate_b.append(bpad)
        w_layers.append(jnp.stack(gate_w))                  # (3, P, P)
        b_layers.append(jnp.stack(gate_b))                  # (3, 1, P)

    w_slab = jnp.stack(w_layers)                            # (L, 3, P, P)
    b_slab = jnp.stack(b_layers)                            # (L, 3, 1, P)

    fc_w = jnp.asarray(params["fc_w"], jnp.float32)         # (num_keys, H)
    fc_b = jnp.asarray(params["fc_b"], jnp.float32)         # (num_keys,)
    wfc = jnp.zeros((P, NPAD), jnp.float32).at[:H, :num_keys].set(fc_w.T)
    bfc = jnp.zeros((1, NPAD), jnp.float32).at[0, :num_keys].set(fc_b)

    return {"w": w_slab, "b": b_slab, "wfc": wfc, "bfc": bfc}


@functools.partial(jax.jit, static_argnames=("num_keys",))
def model_forward(x, w_slab, b_slab, wfc, bfc, *, num_keys):
    """Pallas wrapper matching Model.forward.  x: (batch, input_size)."""
    batch, input_size = x.shape
    num_layers, _, P, _ = w_slab.shape
    NPAD = wfc.shape[1]

    x = x.astype(jnp.float32)

    # One uniform grid path for every batch size: pick a batch tile, pad the
    # batch up to a multiple of it (zero rows -> junk outputs sliced off),
    # pad the feature dim to P (zero weight rows keep it exact).
    bb = min(_BATCH_BLOCK, _round_up(batch, 8))
    padded_batch = _round_up(batch, bb)
    x = jnp.pad(x, ((0, padded_batch - batch), (0, P - input_size)))

    kernel = functools.partial(_deeplog_kernel, num_layers)
    out = pl.pallas_call(
        kernel,
        out_shape=jax.ShapeDtypeStruct((padded_batch, NPAD), jnp.float32),
        grid=(padded_batch // bb,),
        in_specs=[
            pl.BlockSpec((bb, P), lambda i: (i, 0)),
            pl.BlockSpec((num_layers, 3, P, P), lambda i: (0, 0, 0, 0)),
            pl.BlockSpec((num_layers, 3, 1, P), lambda i: (0, 0, 0, 0)),
            pl.BlockSpec((P, NPAD), lambda i: (0, 0)),
            pl.BlockSpec((1, NPAD), lambda i: (0, 0)),
        ],
        out_specs=pl.BlockSpec((bb, NPAD), lambda i: (i, 0)),
        compiler_params=pltpu.CompilerParams(
            dimension_semantics=("parallel",)),
    )(x, w_slab, b_slab, wfc, bfc)

    # Tiny slice; fused into this jit.  Consumers that can work with the
    # padded (B, NPAD) slab may take `out` directly to skip it.
    return out[:batch, :num_keys]


def _reference_forward(x, params, *, hidden_size, num_layers):
    """Pure-JAX reference of the PyTorch forward (h0 = c0 = 0, seq_len = 1)."""
    H = hidden_size
    inp = x
    for layer in range(num_layers):
        w_ih, w_hh, b_ih, b_hh = params["lstm"][layer]
        h_prev = jnp.zeros((x.shape[0], H), jnp.float32)
        c_prev = jnp.zeros_like(h_prev)
        gates = (jnp.dot(inp, w_ih.T, precision="highest")
                 + jnp.dot(h_prev, w_hh.T, precision="highest")
                 + b_ih + b_hh)
        i = jax.nn.sigmoid(gates[:, 0 * H:1 * H])
        f = jax.nn.sigmoid(gates[:, 1 * H:2 * H])
        g = jnp.tanh(gates[:, 2 * H:3 * H])
        o = jax.nn.sigmoid(gates[:, 3 * H:4 * H])
        c = f * c_prev + i * g
        inp = o * jnp.tanh(c)
    return jnp.dot(inp, params["fc_w"].T, precision="highest") + params["fc_b"]


def init_params(key, *, input_size, hidden_size, num_layers, num_keys):
    """Deterministic init mimicking PyTorch uniform(-1/sqrt(H), 1/sqrt(H))."""
    k = 1.0 / jnp.sqrt(jnp.float32(hidden_size))
    params = {"lstm": []}
    for layer in range(num_layers):
        in_dim = input_size if layer == 0 else hidden_size
        key, k1, k2, k3, k4 = jax.random.split(key, 5)
        w_ih = jax.random.uniform(k1, (4 * hidden_size, in_dim), jnp.float32, -k, k)
        w_hh = jax.random.uniform(k2, (4 * hidden_size, hidden_size), jnp.float32, -k, k)
        b_ih = jax.random.uniform(k3, (4 * hidden_size,), jnp.float32, -k, k)
        b_hh = jax.random.uniform(k4, (4 * hidden_size,), jnp.float32, -k, k)
        params["lstm"].append((w_ih, w_hh, b_ih, b_hh))
    key, k1, k2 = jax.random.split(key, 3)
    params["fc_w"] = jax.random.uniform(k1, (num_keys, hidden_size), jnp.float32, -k, k)
    params["fc_b"] = jax.random.uniform(k2, (num_keys,), jnp.float32, -k, k)
    return params


if __name__ == "__main__":
    input_size = 16
    hidden_size = 32
    num_layers = 2
    num_keys = 24
    batch = 8  # x.size(1) after unsqueeze(0) in the PyTorch forward

    root = jax.random.PRNGKey(0)
    pkey, xkey = jax.random.split(root)
    params = init_params(
        pkey,
        input_size=input_size,
        hidden_size=hidden_size,
        num_layers=num_layers,
        num_keys=num_keys,
    )
    x = jax.random.normal(xkey, (batch, input_size), jnp.float32)

    packed = pack_params(
        params,
        input_size=input_size,
        hidden_size=hidden_size,
        num_layers=num_layers,
        num_keys=num_keys,
    )

    out = model_forward(
        x, packed["w"], packed["b"], packed["wfc"], packed["bfc"],
        num_keys=num_keys,
    )
    out = jax.block_until_ready(out)

    ref = _reference_forward(x, params, hidden_size=hidden_size, num_layers=num_layers)
    assert out.shape == (batch, num_keys)
    assert jnp.allclose(out, ref, atol=1e-5, rtol=1e-5), "mismatch vs JAX reference"

    print("KERNEL_OK")
</pallas_src>

<mosaic_0001>
module attributes {stable_mosaic.version = 11 : i64} {
  func.func @_deeplog_kernel(%arg0: i32, %arg1: memref<8x128xf32, #tpu.memory_space<vmem>>, %arg2: memref<2x3x128x128xf32, #tpu.memory_space<vmem>>, %arg3: memref<2x3x1x128xf32, #tpu.memory_space<vmem>>, %arg4: memref<128x128xf32, #tpu.memory_space<vmem>>, %arg5: memref<1x128xf32, #tpu.memory_space<vmem>>, %arg6: memref<8x128xf32, #tpu.memory_space<vmem>>) attributes {dimension_semantics = [#tpu.dimension_semantics<parallel>], iteration_bounds = array<i64: 1>, scalar_prefetch = 0 : i64, scratch_operands = 0 : i64, tpu.core_type = #tpu.core_type<tc>, window_params = [{transform_indices = @transform_0, window_bounds = array<i64: 8, 128>}, {pipeline_mode = #tpu.pipeline_mode<synchronous>, transform_indices = @transform_1, window_bounds = array<i64: 2, 3, 128, 128>}, {pipeline_mode = #tpu.pipeline_mode<synchronous>, transform_indices = @transform_2, window_bounds = array<i64: 2, 3, 1, 128>}, {pipeline_mode = #tpu.pipeline_mode<synchronous>, transform_indices = @transform_3, window_bounds = array<i64: 128, 128>}, {pipeline_mode = #tpu.pipeline_mode<synchronous>, transform_indices = @transform_4, window_bounds = array<i64: 1, 128>}, {transform_indices = @transform_5, window_bounds = array<i64: 8, 128>}]} {
    %c0 = arith.constant 0 : index
    %c0_0 = arith.constant 0 : index
    %0 = vector.load %arg1[%c0, %c0_0] : memref<8x128xf32, #tpu.memory_space<vmem>>, vector<8x128xf32>
    %c0_1 = arith.constant 0 : index
    %c0_2 = arith.constant 0 : index
    %c0_3 = arith.constant 0 : index
    %c0_4 = arith.constant 0 : index
    %1 = vector.load %arg2[%c0_1, %c0_2, %c0_3, %c0_4] : memref<2x3x128x128xf32, #tpu.memory_space<vmem>>, vector<1x1x128x128xf32>
    %2 = vector.shape_cast %1 : vector<1x1x128x128xf32> to vector<128x128xf32>
    %cst = arith.constant dense<0.000000e+00> : vector<8x128xf32>
    %3 = tpu.matmul %0, %2, %cst {dimension_numbers = #tpu.dot_dimension_numbers<[1], [0], [0], [1], [0, 0, 1, 1], [], []>} : vector<8x128xf32>, vector<128x128xf32>, vector<8x128xf32> -> vector<8x128xf32>
    %c0_5 = arith.constant 0 : index
    %c0_6 = arith.constant 0 : index
    %c0_7 = arith.constant 0 : index
    %c0_8 = arith.constant 0 : index
    %4 = vector.load %arg3[%c0_5, %c0_6, %c0_7, %c0_8] : memref<2x3x1x128xf32, #tpu.memory_space<vmem>>, vector<1x1x1x128xf32>
    %5 = vector.shape_cast %4 : vector<1x1x1x128xf32> to vector<1x128xf32>
    %6 = vector.broadcast %5 : vector<1x128xf32> to vector<8x128xf32>
    %7 = arith.addf %3, %6 : vector<8x128xf32>
    %c0_9 = arith.constant 0 : index
    %c1 = arith.constant 1 : index
    %c0_10 = arith.constant 0 : index
    %c0_11 = arith.constant 0 : index
    %8 = vector.load %arg2[%c0_9, %c1, %c0_10, %c0_11] : memref<2x3x128x128xf32, #tpu.memory_space<vmem>>, vector<1x1x128x128xf32>
    %9 = vector.shape_cast %8 : vector<1x1x128x128xf32> to vector<128x128xf32>
    %cst_12 = arith.constant dense<0.000000e+00> : vector<8x128xf32>
    %10 = tpu.matmul %0, %9, %cst_12 {dimension_numbers = #tpu.dot_dimension_numbers<[1], [0], [0], [1], [0, 0, 1, 1], [], []>} : vector<8x128xf32>, vector<128x128xf32>, vector<8x128xf32> -> vector<8x128xf32>
    %c0_13 = arith.constant 0 : index
    %c1_14 = arith.constant 1 : index
    %c0_15 = arith.constant 0 : index
    %c0_16 = arith.constant 0 : index
    %11 = vector.load %arg3[%c0_13, %c1_14, %c0_15, %c0_16] : memref<2x3x1x128xf32, #tpu.memory_space<vmem>>, vector<1x1x1x128xf32>
    %12 = vector.shape_cast %11 : vector<1x1x1x128xf32> to vector<1x128xf32>
    %13 = vector.broadcast %12 : vector<1x128xf32> to vector<8x128xf32>
    %14 = arith.addf %10, %13 : vector<8x128xf32>
    %c0_17 = arith.constant 0 : index
    %c2 = arith.constant 2 : index
    %c0_18 = arith.constant 0 : index
    %c0_19 = arith.constant 0 : index
    %15 = vector.load %arg2[%c0_17, %c2, %c0_18, %c0_19] : memref<2x3x128x128xf32, #tpu.memory_space<vmem>>, vector<1x1x128x128xf32>
    %16 = vector.shape_cast %15 : vector<1x1x128x128xf32> to vector<128x128xf32>
    %cst_20 = arith.constant dense<0.000000e+00> : vector<8x128xf32>
    %17 = tpu.matmul %0, %16, %cst_20 {dimension_numbers = #tpu.dot_dimension_numbers<[1], [0], [0], [1], [0, 0, 1, 1], [], []>} : vector<8x128xf32>, vector<128x128xf32>, vector<8x128xf32> -> vector<8x128xf32>
    %c0_21 = arith.constant 0 : index
    %c2_22 = arith.constant 2 : index
    %c0_23 = arith.constant 0 : index
    %c0_24 = arith.constant 0 : index
    %18 = vector.load %arg3[%c0_21, %c2_22, %c0_23, %c0_24] : memref<2x3x1x128xf32, #tpu.memory_space<vmem>>, vector<1x1x1x128xf32>
    %19 = vector.shape_cast %18 : vector<1x1x1x128xf32> to vector<1x128xf32>
    %20 = vector.broadcast %19 : vector<1x128xf32> to vector<8x128xf32>
    %21 = arith.addf %17, %20 : vector<8x128xf32>
    %22 = arith.negf %7 : vector<8x128xf32>
    %23 = math.exp %22 : vector<8x128xf32>
    %cst_25 = arith.constant 1.000000e+00 : f32
    %24 = vector.broadcast %cst_25 : f32 to vector<8x128xf32>
    %25 = arith.addf %24, %23 : vector<8x128xf32>
    %26 = arith.divf %24, %25 : vector<8x128xf32>
    %27 = math.tanh %21 : vector<8x128xf32>
    %28 = arith.mulf %26, %27 : vector<8x128xf32>
    %29 = arith.negf %14 : vector<8x128xf32>
    %30 = math.exp %29 : vector<8x128xf32>
    %cst_26 = arith.constant 1.000000e+00 : f32
    %31 = vector.broadcast %cst_26 : f32 to vector<8x128xf32>
    %32 = arith.addf %31, %30 : vector<8x128xf32>
    %33 = arith.divf %31, %32 : vector<8x128xf32>
    %34 = math.tanh %28 : vector<8x128xf32>
    %35 = arith.mulf %33, %34 : vector<8x128xf32>
    %c1_27 = arith.constant 1 : index
    %c0_28 = arith.constant 0 : index
    %c0_29 = arith.constant 0 : index
    %c0_30 = arith.constant 0 : index
    %36 = vector.load %arg2[%c1_27, %c0_28, %c0_29, %c0_30] : memref<2x3x128x128xf32, #tpu.memory_space<vmem>>, vector<1x1x128x128xf32>
    %37 = vector.shape_cast %36 : vector<1x1x128x128xf32> to vector<128x128xf32>
    %cst_31 = arith.constant dense<0.000000e+00> : vector<8x128xf32>
    %38 = tpu.matmul %35, %37, %cst_31 {dimension_numbers = #tpu.dot_dimension_numbers<[1], [0], [0], [1], [0, 0, 1, 1], [], []>} : vector<8x128xf32>, vector<128x128xf32>, vector<8x128xf32> -> vector<8x128xf32>
    %c1_32 = arith.constant 1 : index
    %c0_33 = arith.constant 0 : index
    %c0_34 = arith.constant 0 : index
    %c0_35 = arith.constant 0 : index
    %39 = vector.load %arg3[%c1_32, %c0_33, %c0_34, %c0_35] : memref<2x3x1x128xf32, #tpu.memory_space<vmem>>, vector<1x1x1x128xf32>
    %40 = vector.shape_cast %39 : vector<1x1x1x128xf32> to vector<1x128xf32>
    %41 = vector.broadcast %40 : vector<1x128xf32> to vector<8x128xf32>
    %42 = arith.addf %38, %41 : vector<8x128xf32>
    %c1_36 = arith.constant 1 : index
    %c1_37 = arith.constant 1 : index
    %c0_38 = arith.constant 0 : index
    %c0_39 = arith.constant 0 : index
    %43 = vector.load %arg2[%c1_36, %c1_37, %c0_38, %c0_39] : memref<2x3x128x128xf32, #tpu.memory_space<vmem>>, vector<1x1x128x128xf32>
    %44 = vector.shape_cast %43 : vector<1x1x128x128xf32> to vector<128x128xf32>
    %cst_40 = arith.constant dense<0.000000e+00> : vector<8x128xf32>
    %45 = tpu.matmul %35, %44, %cst_40 {dimension_numbers = #tpu.dot_dimension_numbers<[1], [0], [0], [1], [0, 0, 1, 1], [], []>} : vector<8x128xf32>, vector<128x128xf32>, vector<8x128xf32> -> vector<8x128xf32>
    %c1_41 = arith.constant 1 : index
    %c1_42 = arith.constant 1 : index
    %c0_43 = arith.constant 0 : index
    %c0_44 = arith.constant 0 : index
    %46 = vector.load %arg3[%c1_41, %c1_42, %c0_43, %c0_44] : memref<2x3x1x128xf32, #tpu.memory_space<vmem>>, vector<1x1x1x128xf32>
    %47 = vector.shape_cast %46 : vector<1x1x1x128xf32> to vector<1x128xf32>
    %48 = vector.broadcast %47 : vector<1x128xf32> to vector<8x128xf32>
    %49 = arith.addf %45, %48 : vector<8x128xf32>
    %c1_45 = arith.constant 1 : index
    %c2_46 = arith.constant 2 : index
    %c0_47 = arith.constant 0 : index
    %c0_48 = arith.constant 0 : index
    %50 = vector.load %arg2[%c1_45, %c2_46, %c0_47, %c0_48] : memref<2x3x128x128xf32, #tpu.memory_space<vmem>>, vector<1x1x128x128xf32>
    %51 = vector.shape_cast %50 : vector<1x1x128x128xf32> to vector<128x128xf32>
    %cst_49 = arith.constant dense<0.000000e+00> : vector<8x128xf32>
    %52 = tpu.matmul %35, %51, %cst_49 {dimension_numbers = #tpu.dot_dimension_numbers<[1], [0], [0], [1], [0, 0, 1, 1], [], []>} : vector<8x128xf32>, vector<128x128xf32>, vector<8x128xf32> -> vector<8x128xf32>
    %c1_50 = arith.constant 1 : index
    %c2_51 = arith.constant 2 : index
    %c0_52 = arith.constant 0 : index
    %c0_53 = arith.constant 0 : index
    %53 = vector.load %arg3[%c1_50, %c2_51, %c0_52, %c0_53] : memref<2x3x1x128xf32, #tpu.memory_space<vmem>>, vector<1x1x1x128xf32>
    %54 = vector.shape_cast %53 : vector<1x1x1x128xf32> to vector<1x128xf32>
    %55 = vector.broadcast %54 : vector<1x128xf32> to vector<8x128xf32>
    %56 = arith.addf %52, %55 : vector<8x128xf32>
    %57 = arith.negf %42 : vector<8x128xf32>
    %58 = math.exp %57 : vector<8x128xf32>
    %cst_54 = arith.constant 1.000000e+00 : f32
    %59 = vector.broadcast %cst_54 : f32 to vector<8x128xf32>
    %60 = arith.addf %59, %58 : vector<8x128xf32>
    %61 = arith.divf %59, %60 : vector<8x128xf32>
    %62 = math.tanh %56 : vector<8x128xf32>
    %63 = arith.mulf %61, %62 : vector<8x128xf32>
    %64 = arith.negf %49 : vector<8x128xf32>
    %65 = math.exp %64 : vector<8x128xf32>
    %cst_55 = arith.constant 1.000000e+00 : f32
    %66 = vector.broadcast %cst_55 : f32 to vector<8x128xf32>
    %67 = arith.addf %66, %65 : vector<8x128xf32>
    %68 = arith.divf %66, %67 : vector<8x128xf32>
    %69 = math.tanh %63 : vector<8x128xf32>
    %70 = arith.mulf %68, %69 : vector<8x128xf32>
    %c0_56 = arith.constant 0 : index
    %c0_57 = arith.constant 0 : index
    %71 = vector.load %arg4[%c0_56, %c0_57] : memref<128x128xf32, #tpu.memory_space<vmem>>, vector<128x128xf32>
    %cst_58 = arith.constant dense<0.000000e+00> : vector<8x128xf32>
    %72 = tpu.matmul %70, %71, %cst_58 {dimension_numbers = #tpu.dot_dimension_numbers<[1], [0], [0], [1], [0, 0, 1, 1], [], []>} : vector<8x128xf32>, vector<128x128xf32>, vector<8x128xf32> -> vector<8x128xf32>
    %c0_59 = arith.constant 0 : index
    %c0_60 = arith.constant 0 : index
    %73 = vector.load %arg5[%c0_59, %c0_60] : memref<1x128xf32, #tpu.memory_space<vmem>>, vector<1x128xf32>
    %74 = vector.broadcast %73 : vector<1x128xf32> to vector<8x128xf32>
    %75 = arith.addf %72, %74 : vector<8x128xf32>
    %c0_61 = arith.constant 0 : index
    %c0_62 = arith.constant 0 : index
    %76 = vector.load %arg6[%c0_61, %c0_62] : memref<8x128xf32, #tpu.memory_space<vmem>>, vector<8x128xf32>
    tpu.vector_store %arg6[%c0_61, %c0_62], %75 {strides = array<i32>} : memref<8x128xf32, #tpu.memory_space<vmem>>, vector<8x128xf32>,
    return
  }
  func.func @transform_0(%arg0: i32) -> (i32, i32) {
    %c0_i32 = arith.constant 0 : i32
    %c0_i32_0 = arith.constant 0 : i32
    return %arg0, %c0_i32 : i32, i32
  }
  func.func @transform_1(%arg0: i32) -> (i32, i32, i32, i32) {
    %c0_i32 = arith.constant 0 : i32
    %c0_i32_0 = arith.constant 0 : i32
    %c0_i32_1 = arith.constant 0 : i32
    %c0_i32_2 = arith.constant 0 : i32
    %c0_i32_3 = arith.constant 0 : i32
    return %c0_i32, %c0_i32_0, %c0_i32_1, %c0_i32_2 : i32, i32, i32, i32
  }
  func.func @transform_2(%arg0: i32) -> (i32, i32, i32, i32) {
    %c0_i32 = arith.constant 0 : i32
    %c0_i32_0 = arith.constant 0 : i32
    %c0_i32_1 = arith.constant 0 : i32
    %c0_i32_2 = arith.constant 0 : i32
    %c0_i32_3 = arith.constant 0 : i32
    return %c0_i32, %c0_i32_0, %c0_i32_1, %c0_i32_2 : i32, i32, i32, i32
  }
  func.func @transform_3(%arg0: i32) -> (i32, i32) {
    %c0_i32 = arith.constant 0 : i32
    %c0_i32_0 = arith.constant 0 : i32
    %c0_i32_1 = arith.constant 0 : i32
    return %c0_i32, %c0_i32_0 : i32, i32
  }
  func.func @transform_4(%arg0: i32) -> (i32, i32) {
    %c0_i32 = arith.constant 0 : i32
    %c0_i32_0 = arith.constant 0 : i32
    %c0_i32_1 = arith.constant 0 : i32
    return %c0_i32, %c0_i32_0 : i32, i32
  }
  func.func @transform_5(%arg0: i32) -> (i32, i32) {
    %c0_i32 = arith.constant 0 : i32
    %c0_i32_0 = arith.constant 0 : i32
    return %arg0, %c0_i32 : i32, i32
  }
}

</mosaic_0001>

<llo_original>
// kernel: model_forward.1
$region0: #{model_forward.1}
  #allocation0 [shape = 'u32[]', space=smem, size = 0x4, offset = 0x4, fixed_abs, tag = 'smem constant byte address 0x4 - core index']
  #allocation1 [shape = 'u32[72,128]{1,0:T(1,128)}', space=vmem, size = 0x9000, scoped, tag = 'internal scratch']
  %s0 = inlined_call_operand.vmem [shape: f32[8,128], index: 0, kind: input, shape index: {}]
  %s1 = inlined_call_operand.hbm [shape: f32[2,3,128,128], index: 1, kind: input, shape index: {}]
  %s2 = inlined_call_operand.vmem [shape: f32[2,3,1,128], index: 2, kind: input, shape index: {}]
  %s3 = inlined_call_operand.hbm [shape: f32[128,128], index: 3, kind: input, shape index: {}]
  %s4 = inlined_call_operand.vmem [shape: f32[1,128], index: 4, kind: input, shape index: {}]
  %s5 = inlined_call_operand.hbm [shape: f32[8,128], index: 5, kind: output, shape index: {}]
  %s6 = sld [smem:[#allocation0]]
  $region38: #{model_forward.1} parent=0
    _
  %s8 = ssub.s32 1, %s6
  %s9 = scalar_select 0, %s8, %s6
  $region1: #{model_forward.1} parent=0
    #allocation2 [shape = 'u8[393216]{0}', space=vmem, size = 0x60000, scoped, tag = 'input window, operand 1, single buffered']
    #allocation3 [shape = 's32[1]{0}', space=sflag, size = 0x4, scoped, tag = 'scoped memory for model_forward.1']
    #allocation4 [shape = 's32[1]{0}', space=sflag, size = 0x4, scoped, tag = 'scoped memory for model_forward.1']
    #allocation5 [shape = 'u8[65536]{0}', space=vmem, size = 0x10000, scoped, tag = 'input window, operand 3, single buffered']
    #allocation6 [shape = 's32[1]{0}', space=sflag, size = 0x4, scoped, tag = 'scoped memory for model_forward.1']
    #allocation7 [shape = 'u8[4096]{0}', space=vmem, size = 0x1000, scoped, tag = 'output window, operand 0, single buffered']
    %10 = vsyncpa [#allocation3], 0
    %11 = vsyncpa [#allocation6], 0
    %12 = vsyncpa [#allocation4], 0
    // Predicated region
    $region2: #{model_forward.1} parent=1 // pred_check
      _
    $region3: #{model_forward.1} parent=1 // pred_check_branch
      %14 = sbr.rel (0) target = $region5
    $region4: #{model_forward.1} parent=1 // pred_region
      _
    $region5: #{model_forward.1} parent=1 // pred_fallthru
      _
    // Predicated region
    $region6: #{model_forward.1} parent=1 // pred_check
      _
    $region7: #{model_forward.1} parent=1 // pred_check_branch
      %16 = sbr.rel (0) target = $region9
    $region8: #{model_forward.1} parent=1 // pred_region
      %18 = vsyncadd [#allocation3], 0
      %s19 = sshll.u32 %s1, 4
      %s20 = int_to_ptr.hbm [resolvable:$true] %s19
      %s21 = sshll.u32 [#allocation2], 4
      %s22 = int_to_ptr.vmem [resolvable:$true] %s21
      %27 = dma.hbm_to_vmem [thread:$0]  %s20, 12288, %s22, [#allocation3], 128, 128, 8
    $region9: #{model_forward.1} parent=1 // pred_fallthru
      _
    // Predicated region
    $region10: #{model_forward.1} parent=1 // pred_check
      _
    $region11: #{model_forward.1} parent=1 // pred_check_branch
      %29 = sbr.rel (0) target = $region13
    $region12: #{model_forward.1} parent=1 // pred_region
      _
    $region13: #{model_forward.1} parent=1 // pred_fallthru
      _
    // Predicated region
    $region14: #{model_forward.1} parent=1 // pred_check
      _
    $region15: #{model_forward.1} parent=1 // pred_check_branch
      %31 = sbr.rel (0) target = $region17
    $region16: #{model_forward.1} parent=1 // pred_region
      %33 = vsyncadd [#allocation6], 0
      %s34 = sshll.u32 %s3, 4
      %s35 = int_to_ptr.hbm [resolvable:$true] %s34
      %s36 = sshll.u32 [#allocation5], 4
      %s37 = int_to_ptr.vmem [resolvable:$true] %s36
      %42 = dma.hbm_to_vmem [thread:$0]  %s35, 2048, %s37, [#allocation6], 128, 128, 8
    $region17: #{model_forward.1} parent=1 // pred_fallthru
      _
    // Predicated region
    $region18: #{model_forward.1} parent=1 // pred_check
      _
    $region19: #{model_forward.1} parent=1 // pred_check_branch
      %44 = sbr.rel (0) target = $region21
    $region20: #{model_forward.1} parent=1 // pred_region
      _
    $region21: #{model_forward.1} parent=1 // pred_fallthru
      _
    // Predicated region
    $region22: #{model_forward.1} parent=1 // pred_check
      _
    $region23: #{model_forward.1} parent=1 // pred_check_branch
      %46 = sbr.rel (0) target = $region25
    $region24: #{model_forward.1} parent=1 // pred_region
      %48 = dma.done [#allocation3], 12288
    $region25: #{model_forward.1} parent=1 // pred_fallthru
      _
    // Predicated region
    $region26: #{model_forward.1} parent=1 // pred_check
      _
    $region27: #{model_forward.1} parent=1 // pred_check_branch
      %50 = sbr.rel (0) target = $region29
    $region28: #{model_forward.1} parent=1 // pred_region
      %52 = dma.done [#allocation6], 2048
    $region29: #{model_forward.1} parent=1 // pred_fallthru
      _
    %v53 = vld [vmem:[%s0] sm:$0xff]
    %v54 = vld [vmem:[#allocation2] sm:$0xff]
    %v55 = vld [vmem:[#allocation2 + $0x8] sm:$0xff]
    %v56 = vld [vmem:[#allocation2 + $0x10] sm:$0xff]
    %v57 = vld [vmem:[#allocation2 + $0x18] sm:$0xff]
    %v58 = vld [vmem:[#allocation2 + $0x20] sm:$0xff]
    %v59 = vld [vmem:[#allocation2 + $0x28] sm:$0xff]
    %v60 = vld [vmem:[#allocation2 + $0x30] sm:$0xff]
    %v61 = vld [vmem:[#allocation2 + $0x38] sm:$0xff]
    %v62 = vld [vmem:[#allocation2 + $0x40] sm:$0xff]
    %v63 = vld [vmem:[#allocation2 + $0x48] sm:$0xff]
    %v64 = vld [vmem:[#allocation2 + $0x50] sm:$0xff]
    %v65 = vld [vmem:[#allocation2 + $0x58] sm:$0xff]
    %v66 = vld [vmem:[#allocation2 + $0x60] sm:$0xff]
    %v67 = vld [vmem:[#allocation2 + $0x68] sm:$0xff]
    %v68 = vld [vmem:[#allocation2 + $0x70] sm:$0xff]
    %v69 = vld [vmem:[#allocation2 + $0x78] sm:$0xff]
    %v70 = vld [vmem:[%s2] sm:$0x1]
    %v72 = vperm.slane %v70, 0
    %74 = vmatpush.msra.mxu0 %v69
    %75 = vmatpush.msra.mxu0 %v68
    %76 = vmatpush.msra.mxu0 %v67
    %77 = vmatpush.msra.mxu0 %v66
    %78 = vmatpush.msra.mxu0 %v65
    %79 = vmatpush.msra.mxu0 %v64
    %80 = vmatpush.msra.mxu0 %v63
    %81 = vmatpush.msra.mxu0 %v62
    %82 = vmatpush.msra.mxu0 %v61
    %83 = vmatpush.msra.mxu0 %v60
    %84 = vmatpush.msra.mxu0 %v59
    %85 = vmatpush.msra.mxu0 %v58
    %86 = vmatpush.msra.mxu0 %v57
    %87 = vmatpush.msra.mxu0 %v56
    %88 = vmatpush.msra.mxu0 %v55
    %89 = vmatpush.msra.mxu0 %v54
    %90 = vmatmul.f32.gmra.mxu0 %v53
    %v91 = vpop.f32.mrf.mxu0
    %v92 = vadd.f32 %v72, %v91
    %93 = vdwg.mxu0
    %s94 = scalar_lea.vmem [#allocation2], 128
    %v95 = vld [vmem:[%s94] sm:$0xff]
    %v96 = vld [vmem:[%s94 + $0x8] sm:$0xff]
    %v97 = vld [vmem:[%s94 + $0x10] sm:$0xff]
    %v98 = vld [vmem:[%s94 + $0x18] sm:$0xff]
    %v99 = vld [vmem:[%s94 + $0x20] sm:$0xff]
    %v100 = vld [vmem:[%s94 + $0x28] sm:$0xff]
    %v101 = vld [vmem:[%s94 + $0x30] sm:$0xff]
    %v102 = vld [vmem:[%s94 + $0x38] sm:$0xff]
    %v103 = vld [vmem:[%s94 + $0x40] sm:$0xff]
    %v104 = vld [vmem:[%s94 + $0x48] sm:$0xff]
    %v105 = vld [vmem:[%s94 + $0x50] sm:$0xff]
    %v106 = vld [vmem:[%s94 + $0x58] sm:$0xff]
    %v107 = vld [vmem:[%s94 + $0x60] sm:$0xff]
    %v108 = vld [vmem:[%s94 + $0x68] sm:$0xff]
    %v109 = vld [vmem:[%s94 + $0x70] sm:$0xff]
    %v110 = vld [vmem:[%s94 + $0x78] sm:$0xff]
    %s111 = scalar_lea.vmem %s2, 1
    %v112 = vld [vmem:[%s111] sm:$0x1]
    %v114 = vperm.slane %v112, 0
    %116 = vmatpush.msra.mxu0 %v110
    %117 = vmatpush.msra.mxu0 %v109
    %118 = vmatpush.msra.mxu0 %v108
    %119 = vmatpush.msra.mxu0 %v107
    %120 = vmatpush.msra.mxu0 %v106
    %121 = vmatpush.msra.mxu0 %v105
    %122 = vmatpush.msra.mxu0 %v104
    %123 = vmatpush.msra.mxu0 %v103
    %124 = vmatpush.msra.mxu0 %v102
    %125 = vmatpush.msra.mxu0 %v101
    %126 = vmatpush.msra.mxu0 %v100
    %127 = vmatpush.msra.mxu0 %v99
    %128 = vmatpush.msra.mxu0 %v98
    %129 = vmatpush.msra.mxu0 %v97
    %130 = vmatpush.msra.mxu0 %v96
    %131 = vmatpush.msra.mxu0 %v95
    %132 = vmatmul.f32.gmra.mxu0 %v53
    %v133 = vpop.f32.mrf.mxu0
    %v134 = vadd.f32 %v114, %v133
    %135 = vdwg.mxu0
    %s136 = scalar_lea.vmem [#allocation2], 256
    %v137 = vld [vmem:[%s136] sm:$0xff]
    %v138 = vld [vmem:[%s136 + $0x8] sm:$0xff]
    %v139 = vld [vmem:[%s136 + $0x10] sm:$0xff]
    %v140 = vld [vmem:[%s136 + $0x18] sm:$0xff]
    %v141 = vld [vmem:[%s136 + $0x20] sm:$0xff]
    %v142 = vld [vmem:[%s136 + $0x28] sm:$0xff]
    %v143 = vld [vmem:[%s136 + $0x30] sm:$0xff]
    %v144 = vld [vmem:[%s136 + $0x38] sm:$0xff]
    %v145 = vld [vmem:[%s136 + $0x40] sm:$0xff]
    %v146 = vld [vmem:[%s136 + $0x48] sm:$0xff]
    %v147 = vld [vmem:[%s136 + $0x50] sm:$0xff]
    %v148 = vld [vmem:[%s136 + $0x58] sm:$0xff]
    %v149 = vld [vmem:[%s136 + $0x60] sm:$0xff]
    %v150 = vld [vmem:[%s136 + $0x68] sm:$0xff]
    %v151 = vld [vmem:[%s136 + $0x70] sm:$0xff]
    %v152 = vld [vmem:[%s136 + $0x78] sm:$0xff]
    %s153 = scalar_lea.vmem %s2, 2
    %v154 = vld [vmem:[%s153] sm:$0x1]
    %v156 = vperm.slane %v154, 0
    %158 = vmatpush.msra.mxu0 %v152
    %159 = vmatpush.msra.mxu0 %v151
    %160 = vmatpush.msra.mxu0 %v150
    %161 = vmatpush.msra.mxu0 %v149
    %162 = vmatpush.msra.mxu0 %v148
    %163 = vmatpush.msra.mxu0 %v147
    %164 = vmatpush.msra.mxu0 %v146
    %165 = vmatpush.msra.mxu0 %v145
    %166 = vmatpush.msra.mxu0 %v144
    %167 = vmatpush.msra.mxu0 %v143
    %168 = vmatpush.msra.mxu0 %v142
    %169 = vmatpush.msra.mxu0 %v141
    %170 = vmatpush.msra.mxu0 %v140
    %171 = vmatpush.msra.mxu0 %v139
    %172 = vmatpush.msra.mxu0 %v138
    %173 = vmatpush.msra.mxu0 %v137
    %174 = vmatmul.f32.gmra.mxu0 %v53
    %v175 = vpop.f32.mrf.mxu0
    %v176 = vadd.f32 %v156, %v175
    %177 = vdwg.mxu0
    %v178 = vxor.u32 %v92, 2147483648
    %v179 = vmul.f32 %v178, 1.442695
    %v180 = vpow.pop %v179
    %v181 = vadd.f32 %v180, 1.0
    %v182 = vrcp.pop %v181
    %v183 = vmul.f32 %v181, %v182
    %v184 = vsub.f32 1.0, %v183
    %v185 = vmul.f32 %v182, %v184
    %v186 = vadd.f32 %v182, %v185
    %vm187 = vweird.f32 %v181
    %vm188 = vweird.f32 %v182
    %vm189 = vmor %vm187, %vm188
    %v190 = vsel %vm189, %v182, %v186
    %v191 = vand.u32 2147483647, %v181
    %vm192 = vcmp.eq.f32.partialorder %v191, 8.507059e+37
    %v193 = vand.u32 %v181, 2147483648
    %v194 = vor.u32 1.1754944e-38, %v193
    %v195 = vsel %vm192, %v194, %v190
    %v196 = vmul.f32 1.0, %v195
    %v197 = vtanh.pop %v176
    %v198 = vmul.f32 %v196, %v197
    %v199 = vxor.u32 %v134, 2147483648
    %v200 = vmul.f32 %v199, 1.442695
    %v201 = vpow.pop %v200
    %v202 = vadd.f32 %v201, 1.0
    %v203 = vrcp.pop %v202
    %v204 = vmul.f32 %v202, %v203
    %v205 = vsub.f32 1.0, %v204
    %v206 = vmul.f32 %v203, %v205
    %v207 = vadd.f32 %v203, %v206
    %vm208 = vweird.f32 %v202
    %vm209 = vweird.f32 %v203
    %vm210 = vmor %vm208, %vm209
    %v211 = vsel %vm210, %v203, %v207
    %v212 = vand.u32 2147483647, %v202
    %vm213 = vcmp.eq.f32.partialorder %v212, 8.507059e+37
    %v214 = vand.u32 %v202, 2147483648
    %v215 = vor.u32 1.1754944e-38, %v214
    %v216 = vsel %vm213, %v215, %v211
    %v217 = vmul.f32 1.0, %v216
    %v218 = vtanh.pop %v198
    %v219 = vmul.f32 %v217, %v218
    %s220 = scalar_lea.vmem [#allocation2], 384
    %v221 = vld [vmem:[%s220] sm:$0xff]
    %v222 = vld [vmem:[%s220 + $0x8] sm:$0xff]
    %v223 = vld [vmem:[%s220 + $0x10] sm:$0xff]
    %v224 = vld [vmem:[%s220 + $0x18] sm:$0xff]
    %v225 = vld [vmem:[%s220 + $0x20] sm:$0xff]
    %v226 = vld [vmem:[%s220 + $0x28] sm:$0xff]
    %v227 = vld [vmem:[%s220 + $0x30] sm:$0xff]
    %v228 = vld [vmem:[%s220 + $0x38] sm:$0xff]
    %v229 = vld [vmem:[%s220 + $0x40] sm:$0xff]
    %v230 = vld [vmem:[%s220 + $0x48] sm:$0xff]
    %v231 = vld [vmem:[%s220 + $0x50] sm:$0xff]
    %v232 = vld [vmem:[%s220 + $0x58] sm:$0xff]
    %v233 = vld [vmem:[%s220 + $0x60] sm:$0xff]
    %v234 = vld [vmem:[%s220 + $0x68] sm:$0xff]
    %v235 = vld [vmem:[%s220 + $0x70] sm:$0xff]
    %v236 = vld [vmem:[%s220 + $0x78] sm:$0xff]
    %s237 = scalar_lea.vmem %s2, 3
    %v238 = vld [vmem:[%s237] sm:$0x1]
    %v240 = vperm.slane %v238, 0
    %242 = vmatpush.msra.mxu0 %v236
    %243 = vmatpush.msra.mxu0 %v235
    %244 = vmatpush.msra.mxu0 %v234
    %245 = vmatpush.msra.mxu0 %v233
    %246 = vmatpush.msra.mxu0 %v232
    %247 = vmatpush.msra.mxu0 %v231
    %248 = vmatpush.msra.mxu0 %v230
    %249 = vmatpush.msra.mxu0 %v229
    %250 = vmatpush.msra.mxu0 %v228
    %251 = vmatpush.msra.mxu0 %v227
    %252 = vmatpush.msra.mxu0 %v226
    %253 = vmatpush.msra.mxu0 %v225
    %254 = vmatpush.msra.mxu0 %v224
    %255 = vmatpush.msra.mxu0 %v223
    %256 = vmatpush.msra.mxu0 %v222
    %257 = vmatpush.msra.mxu0 %v221
    %258 = vmatmul.f32.gmra.mxu0 %v219
    %v259 = vpop.f32.mrf.mxu0
    %v260 = vadd.f32 %v240, %v259
    %261 = vdwg.mxu0
    %s262 = scalar_lea.vmem [#allocation2], 512
    %v263 = vld [vmem:[%s262] sm:$0xff]
    %v264 = vld [vmem:[%s262 + $0x8] sm:$0xff]
    %v265 = vld [vmem:[%s262 + $0x10] sm:$0xff]
    %v266 = vld [vmem:[%s262 + $0x18] sm:$0xff]
    %v267 = vld [vmem:[%s262 + $0x20] sm:$0xff]
    %v268 = vld [vmem:[%s262 + $0x28] sm:$0xff]
    %v269 = vld [vmem:[%s262 + $0x30] sm:$0xff]
    %v270 = vld [vmem:[%s262 + $0x38] sm:$0xff]
    %v271 = vld [vmem:[%s262 + $0x40] sm:$0xff]
    %v272 = vld [vmem:[%s262 + $0x48] sm:$0xff]
    %v273 = vld [vmem:[%s262 + $0x50] sm:$0xff]
    %v274 = vld [vmem:[%s262 + $0x58] sm:$0xff]
    %v275 = vld [vmem:[%s262 + $0x60] sm:$0xff]
    %v276 = vld [vmem:[%s262 + $0x68] sm:$0xff]
    %v277 = vld [vmem:[%s262 + $0x70] sm:$0xff]
    %v278 = vld [vmem:[%s262 + $0x78] sm:$0xff]
    %s279 = scalar_lea.vmem %s2, 4
    %v280 = vld [vmem:[%s279] sm:$0x1]
    %v282 = vperm.slane %v280, 0
    %284 = vmatpush.msra.mxu0 %v278
    %285 = vmatpush.msra.mxu0 %v277
    %286 = vmatpush.msra.mxu0 %v276
    %287 = vmatpush.msra.mxu0 %v275
    %288 = vmatpush.msra.mxu0 %v274
    %289 = vmatpush.msra.mxu0 %v273
    %290 = vmatpush.msra.mxu0 %v272
    %291 = vmatpush.msra.mxu0 %v271
    %292 = vmatpush.msra.mxu0 %v270
    %293 = vmatpush.msra.mxu0 %v269
    %294 = vmatpush.msra.mxu0 %v268
    %295 = vmatpush.msra.mxu0 %v267
    %296 = vmatpush.msra.mxu0 %v266
    %297 = vmatpush.msra.mxu0 %v265
    %298 = vmatpush.msra.mxu0 %v264
    %299 = vmatpush.msra.mxu0 %v263
    %300 = vmatmul.f32.gmra.mxu0 %v219
    %v301 = vpop.f32.mrf.mxu0
    %v302 = vadd.f32 %v282, %v301
    %303 = vdwg.mxu0
    %s304 = scalar_lea.vmem [#allocation2], 640
    %v305 = vld [vmem:[%s304] sm:$0xff]
    %v306 = vld [vmem:[%s304 + $0x8] sm:$0xff]
    %v307 = vld [vmem:[%s304 + $0x10] sm:$0xff]
    %v308 = vld [vmem:[%s304 + $0x18] sm:$0xff]
    %v309 = vld [vmem:[%s304 + $0x20] sm:$0xff]
    %v310 = vld [vmem:[%s304 + $0x28] sm:$0xff]
    %v311 = vld [vmem:[%s304 + $0x30] sm:$0xff]
    %v312 = vld [vmem:[%s304 + $0x38] sm:$0xff]
    %v313 = vld [vmem:[%s304 + $0x40] sm:$0xff]
    %v314 = vld [vmem:[%s304 + $0x48] sm:$0xff]
    %v315 = vld [vmem:[%s304 + $0x50] sm:$0xff]
    %v316 = vld [vmem:[%s304 + $0x58] sm:$0xff]
    %v317 = vld [vmem:[%s304 + $0x60] sm:$0xff]
    %v318 = vld [vmem:[%s304 + $0x68] sm:$0xff]
    %v319 = vld [vmem:[%s304 + $0x70] sm:$0xff]
    %v320 = vld [vmem:[%s304 + $0x78] sm:$0xff]
    %s321 = scalar_lea.vmem %s2, 5
    %v322 = vld [vmem:[%s321] sm:$0x1]
    %v324 = vperm.slane %v322, 0
    %326 = vmatpush.msra.mxu0 %v320
    %327 = vmatpush.msra.mxu0 %v319
    %328 = vmatpush.msra.mxu0 %v318
    %329 = vmatpush.msra.mxu0 %v317
    %330 = vmatpush.msra.mxu0 %v316
    %331 = vmatpush.msra.mxu0 %v315
    %332 = vmatpush.msra.mxu0 %v314
    %333 = vmatpush.msra.mxu0 %v313
    %334 = vmatpush.msra.mxu0 %v312
    %335 = vmatpush.msra.mxu0 %v311
    %336 = vmatpush.msra.mxu0 %v310
    %337 = vmatpush.msra.mxu0 %v309
    %338 = vmatpush.msra.mxu0 %v308
    %339 = vmatpush.msra.mxu0 %v307
    %340 = vmatpush.msra.mxu0 %v306
    %341 = vmatpush.msra.mxu0 %v305
    %342 = vmatmul.f32.gmra.mxu0 %v219
    %v343 = vpop.f32.mrf.mxu0
    %v344 = vadd.f32 %v324, %v343
    %345 = vdwg.mxu0
    %v346 = vxor.u32 %v260, 2147483648
    %v347 = vmul.f32 %v346, 1.442695
    %v348 = vpow.pop %v347
    %v349 = vadd.f32 %v348, 1.0
    %v350 = vrcp.pop %v349
    %v351 = vmul.f32 %v349, %v350
    %v352 = vsub.f32 1.0, %v351
    %v353 = vmul.f32 %v350, %v352
    %v354 = vadd.f32 %v350, %v353
    %vm355 = vweird.f32 %v349
    %vm356 = vweird.f32 %v350
    %vm357 = vmor %vm355, %vm356
    %v358 = vsel %vm357, %v350, %v354
    %v359 = vand.u32 2147483647, %v349
    %vm360 = vcmp.eq.f32.partialorder %v359, 8.507059e+37
    %v361 = vand.u32 %v349, 2147483648
    %v362 = vor.u32 1.1754944e-38, %v361
    %v363 = vsel %vm360, %v362, %v358
    %v364 = vmul.f32 1.0, %v363
    %v365 = vtanh.pop %v344
    %v366 = vmul.f32 %v364, %v365
    %v367 = vxor.u32 %v302, 2147483648
    %v368 = vmul.f32 %v367, 1.442695
    %v369 = vpow.pop %v368
    %v370 = vadd.f32 %v369, 1.0
    %v371 = vrcp.pop %v370
    %v372 = vmul.f32 %v370, %v371
    %v373 = vsub.f32 1.0, %v372
    %v374 = vmul.f32 %v371, %v373
    %v375 = vadd.f32 %v371, %v374
    %vm376 = vweird.f32 %v370
    %vm377 = vweird.f32 %v371
    %vm378 = vmor %vm376, %vm377
    %v379 = vsel %vm378, %v371, %v375
    %v380 = vand.u32 2147483647, %v370
    %vm381 = vcmp.eq.f32.partialorder %v380, 8.507059e+37
    %v382 = vand.u32 %v370, 2147483648
    %v383 = vor.u32 1.1754944e-38, %v382
    %v384 = vsel %vm381, %v383, %v379
    %v385 = vmul.f32 1.0, %v384
    %v386 = vtanh.pop %v366
    %v387 = vmul.f32 %v385, %v386
    %v388 = vld [vmem:[#allocation5] sm:$0xff]
    %v389 = vld [vmem:[#allocation5 + $0x8] sm:$0xff]
    %v390 = vld [vmem:[#allocation5 + $0x10] sm:$0xff]
    %v391 = vld [vmem:[#allocation5 + $0x18] sm:$0xff]
    %v392 = vld [vmem:[#allocation5 + $0x20] sm:$0xff]
    %v393 = vld [vmem:[#allocation5 + $0x28] sm:$0xff]
    %v394 = vld [vmem:[#allocation5 + $0x30] sm:$0xff]
    %v395 = vld [vmem:[#allocation5 + $0x38] sm:$0xff]
    %v396 = vld [vmem:[#allocation5 + $0x40] sm:$0xff]
    %v397 = vld [vmem:[#allocation5 + $0x48] sm:$0xff]
    %v398 = vld [vmem:[#allocation5 + $0x50] sm:$0xff]
    %v399 = vld [vmem:[#allocation5 + $0x58] sm:$0xff]
    %v400 = vld [vmem:[#allocation5 + $0x60] sm:$0xff]
    %v401 = vld [vmem:[#allocation5 + $0x68] sm:$0xff]
    %v402 = vld [vmem:[#allocation5 + $0x70] sm:$0xff]
    %v403 = vld [vmem:[#allocation5 + $0x78] sm:$0xff]
    %v404 = vld [vmem:[%s4] sm:$0x1]
    %v406 = vperm.slane %v404, 0
    %408 = vmatpush.msra.mxu0 %v403
    %409 = vmatpush.msra.mxu0 %v402
    %410 = vmatpush.msra.mxu0 %v401
    %411 = vmatpush.msra.mxu0 %v400
    %412 = vmatpush.msra.mxu0 %v399
    %413 = vmatpush.msra.mxu0 %v398
    %414 = vmatpush.msra.mxu0 %v397
    %415 = vmatpush.msra.mxu0 %v396
    %416 = vmatpush.msra.mxu0 %v395
    %417 = vmatpush.msra.mxu0 %v394
    %418 = vmatpush.msra.mxu0 %v393
    %419 = vmatpush.msra.mxu0 %v392
    %420 = vmatpush.msra.mxu0 %v391
    %421 = vmatpush.msra.mxu0 %v390
    %422 = vmatpush.msra.mxu0 %v389
    %423 = vmatpush.msra.mxu0 %v388
    %424 = vmatmul.f32.gmra.mxu0 %v387
    %v425 = vpop.f32.mrf.mxu0
    %v426 = vadd.f32 %v406, %v425
    %427 = vdwg.mxu0
    %428 = vst [vmem:[#allocation7] sm:$0xff] %v426
    // Predicated region
    $region30: #{model_forward.1} parent=1 // pred_check
      _
    $region31: #{model_forward.1} parent=1 // pred_check_branch
      %430 = sbr.rel (0) target = $region33
    $region32: #{model_forward.1} parent=1 // pred_region
      %432 = vsyncadd [#allocation4], 0
      %s434 = sshll.u32 [#allocation7], 4
      %s435 = int_to_ptr.vmem [resolvable:$true] %s434
      %s436 = sshll.u32 %s5, 4
      %s437 = int_to_ptr.hbm [resolvable:$true] %s436
      %439 = dma.vmem_to_hbm [thread:$0]  %s435, 128, %s437, [#allocation4]
    $region33: #{model_forward.1} parent=1 // pred_fallthru
      _
    // Predicated region
    $region34: #{model_forward.1} parent=1 // pred_check
      _
    $region35: #{model_forward.1} parent=1 // pred_check_branch
      %441 = sbr.rel (0) target = $region37
    $region36: #{model_forward.1} parent=1 // pred_region
      %443 = dma.done [#allocation4], 128
    $region37: #{model_forward.1} parent=1 // pred_fallthru
      _
    %444 = vsyncpa [#allocation3], 1
    %445 = vsyncpa [#allocation6], 1
    %446 = vsyncpa [#allocation4], 1

</llo_original>
